<compile_context>
chip_gen: v5e
topology: v5e:2x2
jax: 0.10.0
libtpu: 0.0.40
codegen_flags: <defaults>
</compile_context>

<pallas_src>
import functools

import jax
import jax.numpy as jnp
from jax.experimental import pallas as pl
from jax.experimental.pallas import tpu as pltpu

_EPS = 1e-5


def _pick_tile_h(H, W, target_rows):
    """Rows per tile.  Full image if it fits; otherwise the largest divisor of H with
    tile_h * W <= target_rows and tile_h * W a multiple of 128 (lane-dense NCHW output
    blocks in pass 2).  Falls back to whole-image tiles."""
    if H * W <= target_rows:
        return H
    best = None
    for th in range(1, H):
        if H % th == 0 and th * W <= target_rows and (th * W) % 128 == 0:
            best = th
    # TODO(synk): relax the divisor constraint with a cdiv grid + masked last tile for
    # awkward H (primes); for now fall back to whole-image tiles.
    return best if best is not None else H


def _pick_chunk_h(tile_h, W, target_chunk_rows=256):
    """Rows per in-kernel accumulation chunk (accumulator stays in vregs)."""
    best = 1
    for ch in range(1, tile_h + 1):
        if tile_h % ch == 0 and ch * W <= target_chunk_rows:
            best = ch
    return best


def _conv_stats_kernel(x_ref, w_ref, y_ref, s_ref, ss_ref, *, tile_h, width, chunk_h):
    """3x3 conv for one row-tile + per-tile BN partial sums.

    x_ref : (1, (tile_h+2)*W, 3*C_in)  kh-halo rows, kw folded into channels
    w_ref : (3, 3*C_in, C_out)         resident weights (one matrix per kh tap)
    y_ref : (1, tile_m, C_out)         conv output (compute dtype)
    s_ref, ss_ref : (1, 1, C_out)      per-tile sum / sum-of-squares (f32)
    """
    c_out = w_ref.shape[2]
    chunk_m = chunk_h * width
    n_chunks = tile_h // chunk_h

    s_acc = jnp.zeros((1, c_out), jnp.float32)
    ss_acc = jnp.zeros((1, c_out), jnp.float32)
    for ci in range(n_chunks):                    # static: every slice start is constant
        row0 = ci * chunk_h
        acc = jnp.zeros((chunk_m, c_out), jnp.float32)
        for kh in range(3):                       # 3 dots with K = 3*C_in, vreg accumulate
            start = (row0 + kh) * width           # aligned sublane slice, no relayout
            slab = x_ref[0, start:start + chunk_m, :]
            acc = acc + jnp.dot(slab, w_ref[kh], preferred_element_type=jnp.float32)
        ybase = row0 * width
        y_ref[0, ybase:ybase + chunk_m, :] = acc.astype(y_ref.dtype)
        s_acc = s_acc + jnp.sum(acc, axis=0, keepdims=True)
        ss_acc = ss_acc + jnp.sum(acc * acc, axis=0, keepdims=True)
    s_ref[0] = s_acc
    ss_ref[0] = ss_acc


def _bn_relu_kernel(y_ref, scale_ref, shift_ref, o_ref):
    """Folded BatchNorm affine + ReLU, with the NHWC->NCHW transpose fused into the store.

    y_ref  : (1, tile_m, C_out)
    scale_ref, shift_ref : (1, C_out)
    o_ref  : (1, C_out, tile_m)   NCHW-layout block (lane-dense last dim)
    """
    y = y_ref[0].astype(jnp.float32)
    z = jnp.maximum(y * scale_ref[...] + shift_ref[...], 0.0)
    o_ref[0] = z.T.astype(o_ref.dtype)            # XLU transpose; pass 2 is memory-bound


def conv_norm_relu(x_nchw, w, conv_bias, gamma, beta,
                   compute_dtype=jnp.bfloat16, eps=_EPS, target_rows=2048):
    """x_nchw: (N, C_in, H, W); w: (C_out, C_in, 3, 3) (PyTorch OIHW).

    Conv2d(3x3, stride 1, pad 1) + BatchNorm2d (training-mode batch stats) + ReLU.
    """
    N, C_in, H, W = x_nchw.shape
    C_out = w.shape[0]
    assert w.shape == (C_out, C_in, 3, 3), "kernel_size=3 only (module default)"

    # A per-channel constant conv bias cancels exactly under training-mode BatchNorm
    # (the batch mean absorbs it), so we never compute with it.
    del conv_bias

    tile_h = _pick_tile_h(H, W, target_rows)
    HT = H // tile_h
    NT = N * HT
    tile_m = tile_h * W
    M = N * H * W
    chunk_h = _pick_chunk_h(tile_h, W)

    # ---- host glue: NCHW -> NHWC, zero-pad, fold kw into channels, row-tile halos ----
    x_nhwc = jnp.transpose(x_nchw, (0, 2, 3, 1))
    x_pad = jnp.pad(x_nhwc, ((0, 0), (1, 1), (1, 1), (0, 0)))            # (N, H+2, W+2, C)
    x_kw = jnp.concatenate([x_pad[:, :, kw:kw + W, :] for kw in range(3)],
                           axis=-1)                                       # (N, H+2, W, 3C)
    halos = [x_kw[:, ht * tile_h: ht * tile_h + tile_h + 2] for ht in range(HT)]
    x_halo = jnp.stack(halos, axis=1).reshape(NT, (tile_h + 2) * W, 3 * C_in)
    x_halo = x_halo.astype(compute_dtype)
    # TODO(synk): when HT > 1 the stacked halos duplicate 2/tile_h of the rows; an
    # element-offset index_map (or manual halo DMA from x_kw) would remove that copy.

    # (O, I, kh, kw) -> (kh, kw, I, O) -> (3, 3*C_in, C_out); rows kw-major to match
    # the channel fold above.
    w_taps = jnp.transpose(w, (2, 3, 1, 0)).reshape(3, 3 * C_in, C_out).astype(compute_dtype)

    g = gamma.astype(jnp.float32).reshape(1, C_out)
    b = beta.astype(jnp.float32).reshape(1, C_out)

    itemsize = jnp.dtype(compute_dtype).itemsize
    out_itemsize = jnp.dtype(x_nchw.dtype).itemsize
    cost1 = pl.CostEstimate(
        flops=2 * NT * tile_m * 9 * C_in * C_out,
        transcendentals=0,
        bytes_accessed=int(NT * (tile_h + 2) * W * 3 * C_in * itemsize
                           + 3 * 3 * C_in * C_out * itemsize
                           + NT * tile_m * C_out * itemsize
                           + 2 * NT * C_out * 4),
    )

    # ---- pass 1: tiled conv + per-tile BN partials ----
    kern1 = functools.partial(_conv_stats_kernel, tile_h=tile_h, width=W, chunk_h=chunk_h)
    y, part_s, part_ss = pl.pallas_call(
        kern1,
        out_shape=(
            jax.ShapeDtypeStruct((NT, tile_m, C_out), compute_dtype),
            jax.ShapeDtypeStruct((NT, 1, C_out), jnp.float32),
            jax.ShapeDtypeStruct((NT, 1, C_out), jnp.float32),
        ),
        grid_spec=pltpu.PrefetchScalarGridSpec(
            num_scalar_prefetch=0,
            grid=(NT,),
            in_specs=[
                pl.BlockSpec((1, (tile_h + 2) * W, 3 * C_in), lambda i: (i, 0, 0)),
                # Resident weights.  TODO(synk): on v7x with wide channels, single-
                # buffer this constant-index block (pipeline_mode=pl.Buffered(1)).
                pl.BlockSpec((3, 3 * C_in, C_out), lambda i: (0, 0, 0)),
            ],
            out_specs=[
                pl.BlockSpec((1, tile_m, C_out), lambda i: (i, 0, 0)),
                pl.BlockSpec((1, 1, C_out), lambda i: (i, 0, 0)),
                pl.BlockSpec((1, 1, C_out), lambda i: (i, 0, 0)),
            ],
        ),
        compiler_params=pltpu.CompilerParams(
            dimension_semantics=("parallel",),
            vmem_limit_bytes=64 * 1024 * 1024,
        ),
        cost_estimate=cost1,
    )(x_halo, w_taps)

    # ---- tiny global BN reduction + affine fold (O(C) work, plain XLA) ----
    total_s = jnp.sum(part_s, axis=0)             # (1, C_out) f32
    total_ss = jnp.sum(part_ss, axis=0)           # (1, C_out) f32
    mean = total_s / M
    # TODO(synk): E[x^2]-E[x]^2 can lose precision for huge M / large activations;
    # per-tile mean-shifted partials would be more robust.
    var = jnp.maximum(total_ss / M - mean * mean, 0.0)       # biased variance (training BN)
    scale = g * jax.lax.rsqrt(var + eps)
    shift = b - mean * scale

    cost2 = pl.CostEstimate(
        flops=3 * NT * tile_m * C_out,
        transcendentals=0,
        bytes_accessed=int(NT * tile_m * C_out * (itemsize + out_itemsize)),
    )

    # ---- pass 2: BN affine + ReLU, NCHW-layout store (fused transpose) ----
    out3 = pl.pallas_call(
        _bn_relu_kernel,
        out_shape=jax.ShapeDtypeStruct((N, C_out, H * W), x_nchw.dtype),
        grid_spec=pltpu.PrefetchScalarGridSpec(
            num_scalar_prefetch=0,
            grid=(NT,),
            in_specs=[
                pl.BlockSpec((1, tile_m, C_out), lambda i: (i, 0, 0)),
                pl.BlockSpec((1, C_out), lambda i: (0, 0)),
                pl.BlockSpec((1, C_out), lambda i: (0, 0)),
            ],
            out_specs=pl.BlockSpec((1, C_out, tile_m), lambda i: (i // HT, 0, i % HT)),
        ),
        compiler_params=pltpu.CompilerParams(
            dimension_semantics=("parallel",),
            vmem_limit_bytes=64 * 1024 * 1024,
        ),
        cost_estimate=cost2,
    )(y, scale, shift)

    return out3.reshape(N, C_out, H, W)           # metadata-only reshape


def reference(x, w, conv_bias, gamma, beta, eps=_EPS):
    y = jax.lax.conv_general_dilated(
        x, w, window_strides=(1, 1), padding=((1, 1), (1, 1)),
        dimension_numbers=("NCHW", "OIHW", "NCHW"),
        precision=jax.lax.Precision.HIGHEST)
    y = y + conv_bias.reshape(1, -1, 1, 1)
    mean = jnp.mean(y, axis=(0, 2, 3), keepdims=True)
    var = jnp.mean((y - mean) ** 2, axis=(0, 2, 3), keepdims=True)
    y = (y - mean) * jax.lax.rsqrt(var + eps)
    y = y * gamma.reshape(1, -1, 1, 1) + beta.reshape(1, -1, 1, 1)
    return jnp.maximum(y, 0.0)


if __name__ == "__main__":
    N, C_in, C_out, H, W = 2, 4, 8, 16, 16

    key = jax.random.PRNGKey(0)
    kx, kw_, kb, kg, kbe = jax.random.split(key, 5)

    x = jax.random.normal(kx, (N, C_in, H, W), dtype=jnp.float32)
    # deterministic synthetic parameters (Conv2d weight/bias + BN gamma/beta)
    w = jax.random.normal(kw_, (C_out, C_in, 3, 3), dtype=jnp.float32) * 0.1
    conv_bias = jax.random.normal(kb, (C_out,), dtype=jnp.float32) * 0.1
    gamma = 1.0 + 0.1 * jax.random.normal(kg, (C_out,), dtype=jnp.float32)
    beta = 0.1 * jax.random.normal(kbe, (C_out,), dtype=jnp.float32)

    ref = reference(x, w, conv_bias, gamma, beta)

    # f32 MXU path: tight tolerance against the XLA reference.
    out_f32 = jax.block_until_ready(
        conv_norm_relu(x, w, conv_bias, gamma, beta, compute_dtype=jnp.float32))
    assert out_f32.shape == (N, C_out, H, W)
    assert jnp.allclose(out_f32, ref, atol=1e-3, rtol=1e-3), "f32 path mismatch vs reference"

    # bf16 MXU path (default): f32 accumulation, looser tolerance.
    out_bf16 = jax.block_until_ready(conv_norm_relu(x, w, conv_bias, gamma, beta))
    assert out_bf16.shape == (N, C_out, H, W)
    assert jnp.allclose(out_bf16, ref, atol=5e-2, rtol=5e-2), "bf16 path mismatch vs reference"

    print("KERNEL_OK")
</pallas_src>

<mosaic_0001>
module attributes {stable_mosaic.version = 11 : i64} {
  func.func @_conv_stats_kernel(%arg0: i32, %arg1: memref<1x288x12xf32, #tpu.memory_space<vmem>>, %arg2: memref<3x12x8xf32, #tpu.memory_space<vmem>>, %arg3: memref<1x256x8xf32, #tpu.memory_space<vmem>>, %arg4: memref<1x1x8xf32, #tpu.memory_space<vmem>>, %arg5: memref<1x1x8xf32, #tpu.memory_space<vmem>>) attributes {dimension_semantics = [#tpu.dimension_semantics<parallel>], iteration_bounds = array<i64: 2>, scalar_prefetch = 0 : i64, scratch_operands = 0 : i64, tpu.core_type = #tpu.core_type<tc>, window_params = [{transform_indices = @transform_0, window_bounds = array<i64: 1, 288, 12>}, {pipeline_mode = #tpu.pipeline_mode<synchronous>, transform_indices = @transform_1, window_bounds = array<i64: 3, 12, 8>}, {transform_indices = @transform_2, window_bounds = array<i64: 1, 256, 8>}, {transform_indices = @transform_3, window_bounds = array<i64: 1, 1, 8>}, {transform_indices = @transform_4, window_bounds = array<i64: 1, 1, 8>}]} {
    %cst = arith.constant 0.000000e+00 : f32
    %0 = vector.broadcast %cst : f32 to vector<1x8xf32>
    %cst_0 = arith.constant 0.000000e+00 : f32
    %1 = vector.broadcast %cst_0 : f32 to vector<1x8xf32>
    %cst_1 = arith.constant 0.000000e+00 : f32
    %2 = vector.broadcast %cst_1 : f32 to vector<256x8xf32>
    %c0 = arith.constant 0 : index
    %c0_2 = arith.constant 0 : index
    %c0_3 = arith.constant 0 : index
    %3 = vector.load %arg1[%c0, %c0_2, %c0_3] : memref<1x288x12xf32, #tpu.memory_space<vmem>>, vector<1x256x12xf32>
    %4 = vector.shape_cast %3 : vector<1x256x12xf32> to vector<256x12xf32>
    %c0_4 = arith.constant 0 : index
    %c0_5 = arith.constant 0 : index
    %c0_6 = arith.constant 0 : index
    %5 = vector.load %arg2[%c0_4, %c0_5, %c0_6] : memref<3x12x8xf32, #tpu.memory_space<vmem>>, vector<1x12x8xf32>
    %6 = vector.shape_cast %5 : vector<1x12x8xf32> to vector<12x8xf32>
    %cst_7 = arith.constant dense<0.000000e+00> : vector<256x8xf32>
    %7 = tpu.matmul %4, %6, %cst_7 {dimension_numbers = #tpu.dot_dimension_numbers<[1], [0], [0], [1], [0, 0, 1, 1], [], []>} : vector<256x12xf32>, vector<12x8xf32>, vector<256x8xf32> -> vector<256x8xf32>
    %8 = arith.addf %2, %7 : vector<256x8xf32>
    %c0_8 = arith.constant 0 : index
    %c16 = arith.constant 16 : index
    %c0_9 = arith.constant 0 : index
    %9 = vector.load %arg1[%c0_8, %c16, %c0_9] : memref<1x288x12xf32, #tpu.memory_space<vmem>>, vector<1x256x12xf32>
    %10 = vector.shape_cast %9 : vector<1x256x12xf32> to vector<256x12xf32>
    %c1 = arith.constant 1 : index
    %c0_10 = arith.constant 0 : index
    %c0_11 = arith.constant 0 : index
    %11 = vector.load %arg2[%c1, %c0_10, %c0_11] : memref<3x12x8xf32, #tpu.memory_space<vmem>>, vector<1x12x8xf32>
    %12 = vector.shape_cast %11 : vector<1x12x8xf32> to vector<12x8xf32>
    %cst_12 = arith.constant dense<0.000000e+00> : vector<256x8xf32>
    %13 = tpu.matmul %10, %12, %cst_12 {dimension_numbers = #tpu.dot_dimension_numbers<[1], [0], [0], [1], [0, 0, 1, 1], [], []>} : vector<256x12xf32>, vector<12x8xf32>, vector<256x8xf32> -> vector<256x8xf32>
    %14 = arith.addf %8, %13 : vector<256x8xf32>
    %c0_13 = arith.constant 0 : index
    %c32 = arith.constant 32 : index
    %c0_14 = arith.constant 0 : index
    %15 = vector.load %arg1[%c0_13, %c32, %c0_14] : memref<1x288x12xf32, #tpu.memory_space<vmem>>, vector<1x256x12xf32>
    %16 = vector.shape_cast %15 : vector<1x256x12xf32> to vector<256x12xf32>
    %c2 = arith.constant 2 : index
    %c0_15 = arith.constant 0 : index
    %c0_16 = arith.constant 0 : index
    %17 = vector.load %arg2[%c2, %c0_15, %c0_16] : memref<3x12x8xf32, #tpu.memory_space<vmem>>, vector<1x12x8xf32>
    %18 = vector.shape_cast %17 : vector<1x12x8xf32> to vector<12x8xf32>
    %cst_17 = arith.constant dense<0.000000e+00> : vector<256x8xf32>
    %19 = tpu.matmul %16, %18, %cst_17 {dimension_numbers = #tpu.dot_dimension_numbers<[1], [0], [0], [1], [0, 0, 1, 1], [], []>} : vector<256x12xf32>, vector<12x8xf32>, vector<256x8xf32> -> vector<256x8xf32>
    %20 = arith.addf %14, %19 : vector<256x8xf32>
    %c0_18 = arith.constant 0 : index
    %c0_19 = arith.constant 0 : index
    %c0_20 = arith.constant 0 : index
    %21 = vector.load %arg3[%c0_18, %c0_19, %c0_20] : memref<1x256x8xf32, #tpu.memory_space<vmem>>, vector<1x256x8xf32>
    %22 = vector.shape_cast %21 : vector<1x256x8xf32> to vector<256x8xf32>
    %23 = vector.shape_cast %20 : vector<256x8xf32> to vector<1x256x8xf32>
    tpu.vector_store %arg3[%c0_18, %c0_19, %c0_20], %23 {strides = array<i32>} : memref<1x256x8xf32, #tpu.memory_space<vmem>>, vector<1x256x8xf32>,
    %cst_21 = arith.constant dense<0.000000e+00> : vector<8xf32>
    %24 = vector.multi_reduction <add>, %20, %cst_21 [0] : vector<256x8xf32> to vector<8xf32>
    %25 = vector.shape_cast %24 : vector<8xf32> to vector<1x8xf32>
    %26 = arith.addf %0, %25 : vector<1x8xf32>
    %27 = arith.mulf %20, %20 : vector<256x8xf32>
    %cst_22 = arith.constant dense<0.000000e+00> : vector<8xf32>
    %28 = vector.multi_reduction <add>, %27, %cst_22 [0] : vector<256x8xf32> to vector<8xf32>
    %29 = vector.shape_cast %28 : vector<8xf32> to vector<1x8xf32>
    %30 = arith.addf %1, %29 : vector<1x8xf32>
    %c0_23 = arith.constant 0 : index
    %c0_24 = arith.constant 0 : index
    %c0_25 = arith.constant 0 : index
    %31 = vector.load %arg4[%c0_23, %c0_24, %c0_25] : memref<1x1x8xf32, #tpu.memory_space<vmem>>, vector<1x1x8xf32>
    %32 = vector.shape_cast %31 : vector<1x1x8xf32> to vector<1x8xf32>
    %33 = vector.shape_cast %26 : vector<1x8xf32> to vector<1x1x8xf32>
    tpu.vector_store %arg4[%c0_23, %c0_24, %c0_25], %33 {strides = array<i32>} : memref<1x1x8xf32, #tpu.memory_space<vmem>>, vector<1x1x8xf32>,
    %c0_26 = arith.constant 0 : index
    %c0_27 = arith.constant 0 : index
    %c0_28 = arith.constant 0 : index
    %34 = vector.load %arg5[%c0_26, %c0_27, %c0_28] : memref<1x1x8xf32, #tpu.memory_space<vmem>>, vector<1x1x8xf32>
    %35 = vector.shape_cast %34 : vector<1x1x8xf32> to vector<1x8xf32>
    %36 = vector.shape_cast %30 : vector<1x8xf32> to vector<1x1x8xf32>
    tpu.vector_store %arg5[%c0_26, %c0_27, %c0_28], %36 {strides = array<i32>} : memref<1x1x8xf32, #tpu.memory_space<vmem>>, vector<1x1x8xf32>,
    return
  }
  func.func @transform_0(%arg0: i32) -> (i32, i32, i32) {
    %c0_i32 = arith.constant 0 : i32
    %c0_i32_0 = arith.constant 0 : i32
    %c0_i32_1 = arith.constant 0 : i32
    return %arg0, %c0_i32, %c0_i32_0 : i32, i32, i32
  }
  func.func @transform_1(%arg0: i32) -> (i32, i32, i32) {
    %c0_i32 = arith.constant 0 : i32
    %c0_i32_0 = arith.constant 0 : i32
    %c0_i32_1 = arith.constant 0 : i32
    %c0_i32_2 = arith.constant 0 : i32
    return %c0_i32, %c0_i32_0, %c0_i32_1 : i32, i32, i32
  }
  func.func @transform_2(%arg0: i32) -> (i32, i32, i32) {
    %c0_i32 = arith.constant 0 : i32
    %c0_i32_0 = arith.constant 0 : i32
    %c0_i32_1 = arith.constant 0 : i32
    return %arg0, %c0_i32, %c0_i32_0 : i32, i32, i32
  }
  func.func @transform_3(%arg0: i32) -> (i32, i32, i32) {
    %c0_i32 = arith.constant 0 : i32
    %c0_i32_0 = arith.constant 0 : i32
    %c0_i32_1 = arith.constant 0 : i32
    return %arg0, %c0_i32, %c0_i32_0 : i32, i32, i32
  }
  func.func @transform_4(%arg0: i32) -> (i32, i32, i32) {
    %c0_i32 = arith.constant 0 : i32
    %c0_i32_0 = arith.constant 0 : i32
    %c0_i32_1 = arith.constant 0 : i32
    return %arg0, %c0_i32, %c0_i32_0 : i32, i32, i32
  }
}

</mosaic_0001>

<llo_original>
// kernel: tpu_custom_call.1
$region0: #{tpu_custom_call.1}
  #allocation0 [shape = 'u32[]', space=smem, size = 0x4, offset = 0x4, fixed_abs, tag = 'smem constant byte address 0x4 - core index']
  #allocation1 [shape = 'u32[72,128]{1,0:T(1,128)}', space=vmem, size = 0x9000, scoped, tag = 'internal scratch']
  %s0 = inlined_call_operand.vmem [shape: f32[2,288,12], index: 0, kind: input, shape index: {}]
  %s1 = inlined_call_operand.vmem [shape: f32[3,12,8], index: 1, kind: input, shape index: {}]
  %s2 = inlined_call_operand.vmem [shape: f32[2,256,8], index: 2, kind: output, shape index: {0}]
  %s3 = inlined_call_operand.hbm [shape: f32[2,1,8], index: 3, kind: output, shape index: {1}]
  %s4 = inlined_call_operand.hbm [shape: f32[2,1,8], index: 4, kind: output, shape index: {2}]
  %5 = xla_tuple %s2, %s3, %s4
  %s6 = sld [smem:[#allocation0]]
  $region57: #{tpu_custom_call.1} parent=0
    _
  %s8 = ssub.s32 1, %s6
  %s9 = scalar_select 0, %s8, %s6
  $region1: #{tpu_custom_call.1} parent=0
    #allocation2 [shape = 'u8[1024]{0}', space=vmem, size = 0x400, scoped, tag = 'output window, operand 1']
    #allocation3 [shape = 's32[2]{0}', space=sflag, size = 0x8, scoped, tag = 'scoped memory for tpu_custom_call.1']
    #allocation4 [shape = 'u8[1024]{0}', space=vmem, size = 0x400, scoped, tag = 'output window, operand 2']
    #allocation5 [shape = 's32[2]{0}', space=sflag, size = 0x8, scoped, tag = 'scoped memory for tpu_custom_call.1']
    %10 = vsyncpa [#allocation3], 0
    %s11 = scalar_lea.sflag [#allocation3], 1
    %12 = vsyncpa %s11, 0
    %13 = vsyncpa [#allocation5], 0
    %s14 = scalar_lea.sflag [#allocation5], 1
    %15 = vsyncpa %s14, 0
    loop: start=0, step=1, limit=4
    $region2: #{tpu_custom_call.1} parent=1 // loop_pre_header
      _
    $region3: #{tpu_custom_call.1} parent=1 // loop_header
      %s17 = sphi 0, %s21
      %p18 = scmp.ge.s32.totalorder %s17, 4
      %s27 = sphi 0, %s29
      %s30 = sphi 0, %s27
      %s31 = sphi 0, %s30
      %s47 = sphi 0, %s31
      %s51 = sphi 0, %s51
      %s53 = sphi 0, %s51
      %s54 = sphi 0, %s53
      %s68 = sphi 0, %s54
      %s74 = sphi 0, %s76
      %s77 = sphi 0, %s74
      %s78 = sphi 0, %s77
      %s94 = sphi 0, %s78
      %s100 = sphi 0, %s102
      %s103 = sphi 0, %s100
      %s104 = sphi 0, %s103
      %s120 = sphi 0, %s104
      %s126 = sphi 0, %s128
      %s129 = sphi 0, %s126
      %s130 = sphi 0, %s129
      %s146 = sphi 0, %s130
    $region4: #{tpu_custom_call.1} parent=1 // loop_header_branch
      %20 = sbr.rel (%p18) target = $region8
    $region5: #{tpu_custom_call.1} parent=1 // loop_body
      %s22 = ssub.s32 %s17, 1
      %s23 = ssub.s32 %s17, 2
      %s24 = sadd.s32 %s17, 1
      %s25 = ssub.s32 %s17, %s24
      %p26 = scmp.eq.s32.totalorder %s25, 0
      %s28 = sadd.s32 %s27, 1
      %s29 = scalar_select %p26, %s27, %s28
      %p32 = pneg %p26
      %p33 = scmp.eq.s32.totalorder %s17, 1
      %p34 = por %p32, %p33
      %p35 = scmp.ne.s32.totalorder %s27, %s30
      %p36 = scmp.eq.s32.totalorder %s17, 0
      %p37 = por %p35, %p36
      %p38 = scmp.ne.s32.totalorder %s27, %s30
      %p39 = scmp.eq.s32.totalorder %s22, 1
      %p40 = por %p38, %p39
      %p41 = scmp.ne.s32.totalorder %s30, %s31
      %p42 = scmp.eq.s32.totalorder %s22, 0
      %p43 = por %p41, %p42
      %p44 = scmp.ne.s32.totalorder %s30, %s31
      %p45 = scmp.eq.s32.totalorder %s23, 1
      %p46 = por %p44, %p45
      %p48 = scmp.ne.s32.totalorder %s31, %s47
      %p49 = scmp.eq.s32.totalorder %s23, 0
      %p50 = por %p48, %p49
      %s52 = sadd.s32 %s51, 1
      %p55 = scmp.eq.s32.totalorder %s17, 1
      %p56 = scmp.ne.s32.totalorder %s51, %s53
      %p57 = scmp.eq.s32.totalorder %s17, 0
      %p58 = por %p56, %p57
      %p59 = scmp.ne.s32.totalorder %s51, %s53
      %p60 = scmp.eq.s32.totalorder %s22, 1
      %p61 = por %p59, %p60
      %p62 = scmp.ne.s32.totalorder %s53, %s54
      %p63 = scmp.eq.s32.totalorder %s22, 0
      %p64 = por %p62, %p63
      %p65 = scmp.ne.s32.totalorder %s53, %s54
      %p66 = scmp.eq.s32.totalorder %s23, 1
      %p67 = por %p65, %p66
      %p69 = scmp.ne.s32.totalorder %s54, %s68
      %p70 = scmp.eq.s32.totalorder %s23, 0
      %p71 = por %p69, %p70
      %s72 = ssub.s32 %s17, %s24
      %p73 = scmp.eq.s32.totalorder %s72, 0
      %s75 = sadd.s32 %s74, 1
      %s76 = scalar_select %p73, %s74, %s75
      %p79 = pneg %p73
      %p80 = scmp.eq.s32.totalorder %s17, 1
      %p81 = por %p79, %p80
      %p82 = scmp.ne.s32.totalorder %s74, %s77
      %p83 = scmp.eq.s32.totalorder %s17, 0
      %p84 = por %p82, %p83
      %p85 = scmp.ne.s32.totalorder %s74, %s77
      %p86 = scmp.eq.s32.totalorder %s22, 1
      %p87 = por %p85, %p86
      %p88 = scmp.ne.s32.totalorder %s77, %s78
      %p89 = scmp.eq.s32.totalorder %s22, 0
      %p90 = por %p88, %p89
      %p91 = scmp.ne.s32.totalorder %s77, %s78
      %p92 = scmp.eq.s32.totalorder %s23, 1
      %p93 = por %p91, %p92
      %p95 = scmp.ne.s32.totalorder %s78, %s94
      %p96 = scmp.eq.s32.totalorder %s23, 0
      %p97 = por %p95, %p96
      %s98 = ssub.s32 %s17, %s24
      %p99 = scmp.eq.s32.totalorder %s98, 0
      %s101 = sadd.s32 %s100, 1
      %s102 = scalar_select %p99, %s100, %s101
      %p105 = pneg %p99
      %p106 = scmp.eq.s32.totalorder %s17, 1
      %p107 = por %p105, %p106
      %p108 = scmp.ne.s32.totalorder %s100, %s103
      %p109 = scmp.eq.s32.totalorder %s17, 0
      %p110 = por %p108, %p109
      %p111 = scmp.ne.s32.totalorder %s100, %s103
      %p112 = scmp.eq.s32.totalorder %s22, 1
      %p113 = por %p111, %p112
      %p114 = scmp.ne.s32.totalorder %s103, %s104
      %p115 = scmp.eq.s32.totalorder %s22, 0
      %p116 = por %p114, %p115
      %p117 = scmp.ne.s32.totalorder %s103, %s104
      %p118 = scmp.eq.s32.totalorder %s23, 1
      %p119 = por %p117, %p118
      %p121 = scmp.ne.s32.totalorder %s104, %s120
      %p122 = scmp.eq.s32.totalorder %s23, 0
      %p123 = por %p121, %p122
      %s124 = ssub.s32 %s17, %s24
      %p125 = scmp.eq.s32.totalorder %s124, 0
      %s127 = sadd.s32 %s126, 1
      %s128 = scalar_select %p125, %s126, %s127
      %p131 = pneg %p125
      %p132 = scmp.eq.s32.totalorder %s17, 1
      %p133 = por %p131, %p132
      %p134 = scmp.ne.s32.totalorder %s126, %s129
      %p135 = scmp.eq.s32.totalorder %s17, 0
      %p136 = por %p134, %p135
      %p137 = scmp.ne.s32.totalorder %s126, %s129
      %p138 = scmp.eq.s32.totalorder %s22, 1
      %p139 = por %p137, %p138
      %p140 = scmp.ne.s32.totalorder %s129, %s130
      %p141 = scmp.eq.s32.totalorder %s22, 0
      %p142 = por %p140, %p141
      %p143 = scmp.ne.s32.totalorder %s129, %s130
      %p144 = scmp.eq.s32.totalorder %s23, 1
      %p145 = por %p143, %p144
      %p147 = scmp.ne.s32.totalorder %s130, %s146
      %p148 = scmp.eq.s32.totalorder %s23, 0
      %p149 = por %p147, %p148
      %p150 = scmp.le.s32.totalorder 1, %s17
      %p151 = scmp.lt.s32.totalorder %s17, 3
      %p152 = pnand %p150, %p151
      %p153 = pneg %p152
      // Predicated region
      $region9: #{tpu_custom_call.1} parent=5 // pred_check
        _
      $region10: #{tpu_custom_call.1} parent=5 // pred_check_branch
        %155 = sbr.rel (%p152) target = $region12
      $region11: #{tpu_custom_call.1} parent=5 // pred_region
        %s156 = ssub.s32 %s17, 1
        // Predicated region
        $region13: #{tpu_custom_call.1} parent=11 // pred_check
          %p157 = pneg %p64
        $region14: #{tpu_custom_call.1} parent=11 // pred_check_branch
          %159 = sbr.rel (%p157) target = $region16
        $region15: #{tpu_custom_call.1} parent=11 // pred_region
          _
        $region16: #{tpu_custom_call.1} parent=11 // pred_fallthru
          _
      $region12: #{tpu_custom_call.1} parent=5 // pred_fallthru
        _
      %p160 = scmp.lt.s32.totalorder %s17, 2
      // Predicated region
      $region17: #{tpu_custom_call.1} parent=5 // pred_check
        %p161 = pneg %p160
      $region18: #{tpu_custom_call.1} parent=5 // pred_check_branch
        %163 = sbr.rel (%p161) target = $region20
      $region19: #{tpu_custom_call.1} parent=5 // pred_region
        // Predicated region
        $region21: #{tpu_custom_call.1} parent=19 // pred_check
          %p164 = pneg %p37
        $region22: #{tpu_custom_call.1} parent=19 // pred_check_branch
          %166 = sbr.rel (%p164) target = $region24
        $region23: #{tpu_custom_call.1} parent=19 // pred_region
          %p167 = scmp.lt.s32.totalorder %s17, 1
          %s168 = scalar_select %p167, %s17, 1
          %s169 = smul.addr %s168, 36
          %s170 = smul.addr %s169, 8
          %s171 = scalar_lea.vmem %s0, %s170
        $region24: #{tpu_custom_call.1} parent=19 // pred_fallthru
          _
      $region20: #{tpu_custom_call.1} parent=5 // pred_fallthru
        _
      %p172 = scmp.le.s32.totalorder 1, %s17
      %p173 = scmp.lt.s32.totalorder %s17, 3
      %p174 = pnand %p172, %p173
      %p175 = pneg %p174
      // Predicated region
      $region25: #{tpu_custom_call.1} parent=5 // pred_check
        _
      $region26: #{tpu_custom_call.1} parent=5 // pred_check_branch
        %177 = sbr.rel (%p174) target = $region28
      $region27: #{tpu_custom_call.1} parent=5 // pred_region
        %s178 = ssub.s32 %s17, 1
        %p179 = scmp.lt.s32.totalorder %s22, 1
        %s180 = scalar_select %p179, %s22, 1
        %s181 = smul.addr %s180, 36
        %s182 = smul.addr %s181, 8
        %s183 = scalar_lea.vmem %s0, %s182
        %p184 = pneg %p43
        %p185 = pneg %p40
        %p186 = pneg %p64
        %p187 = pneg %p61
        %p188 = pneg %p90
        %p189 = pneg %p87
        %p190 = scmp.lt.s32.totalorder %s22, 1
        %s191 = scalar_select %p190, %s22, 1
        %s192 = smul.addr %s191, 32
        %s193 = smul.addr %s192, 8
        %s194 = scalar_lea.vmem %s2, %s193
        %p195 = pneg %p116
        %p196 = pneg %p113
        %s197 = sand.u32 %s103, 1
        %s198 = scalar_lea.sflag [#allocation3], %s197
        %s199 = sand.u32 %s103, 1
        %s200 = scalar_lea.vmem [#allocation2], %s199
        %p201 = pneg %p142
        %p202 = pneg %p139
        %s203 = sand.u32 %s129, 1
        %s204 = scalar_lea.sflag [#allocation5], %s203
        %s205 = sand.u32 %s129, 1
        %s206 = scalar_lea.vmem [#allocation4], %s205
        %p207 = scmp.lt.s32.totalorder %s22, 1
        %s208 = scalar_select %p207, %s22, 1
        %s209 = smul.addr %s208, 36
        %s210 = smul.addr %s209, 8
        %s211 = scalar_lea.vmem %s0, %s210
        %p212 = scmp.lt.s32.totalorder %s22, 1
        %s213 = scalar_select %p212, %s22, 1
        %s214 = smul.addr %s213, 32
        %s215 = smul.addr %s214, 8
        %s216 = scalar_lea.vmem %s2, %s215
        %v217 = vld [vmem:[%s211] sm:$0xff]
        %v218 = vld [vmem:[%s211 + $0x8] sm:$0xff]
        %v219 = vld [vmem:[%s211 + $0x10] sm:$0xff]
        %v220 = vld [vmem:[%s211 + $0x18] sm:$0xff]
        %v221 = vld [vmem:[%s211 + $0x20] sm:$0xff]
        %v222 = vld [vmem:[%s211 + $0x28] sm:$0xff]
        %v223 = vld [vmem:[%s211 + $0x30] sm:$0xff]
        %v224 = vld [vmem:[%s211 + $0x38] sm:$0xff]
        %v225 = vld [vmem:[%s211 + $0x40] sm:$0xff]
        %v226 = vld [vmem:[%s211 + $0x48] sm:$0xff]
        %v227 = vld [vmem:[%s211 + $0x50] sm:$0xff]
        %v228 = vld [vmem:[%s211 + $0x58] sm:$0xff]
        %v229 = vld [vmem:[%s211 + $0x60] sm:$0xff]
        %v230 = vld [vmem:[%s211 + $0x68] sm:$0xff]
        %v231 = vld [vmem:[%s211 + $0x70] sm:$0xff]
        %v232 = vld [vmem:[%s211 + $0x78] sm:$0xff]
        %v233 = vld [vmem:[%s211 + $0x80] sm:$0xff]
        %v234 = vld [vmem:[%s211 + $0x88] sm:$0xff]
        %v235 = vld [vmem:[%s211 + $0x90] sm:$0xff]
        %v236 = vld [vmem:[%s211 + $0x98] sm:$0xff]
        %v237 = vld [vmem:[%s211 + $0xa0] sm:$0xff]
        %v238 = vld [vmem:[%s211 + $0xa8] sm:$0xff]
        %v239 = vld [vmem:[%s211 + $0xb0] sm:$0xff]
        %v240 = vld [vmem:[%s211 + $0xb8] sm:$0xff]
        %v241 = vld [vmem:[%s211 + $0xc0] sm:$0xff]
        %v242 = vld [vmem:[%s211 + $0xc8] sm:$0xff]
        %v243 = vld [vmem:[%s211 + $0xd0] sm:$0xff]
        %v244 = vld [vmem:[%s211 + $0xd8] sm:$0xff]
        %v245 = vld [vmem:[%s211 + $0xe0] sm:$0xff]
        %v246 = vld [vmem:[%s211 + $0xe8] sm:$0xff]
        %v247 = vld [vmem:[%s211 + $0xf0] sm:$0xff]
        %v248 = vld [vmem:[%s211 + $0xf8] sm:$0xff]
        %v249 = vld [vmem:[%s1] sm:$0xff]
        %v250 = vld [vmem:[%s1 + $0x8] sm:$0xf]
        %v251 = vld [vmem:[%s211 + $0x100] sm:$0xff]
        %v252 = vld [vmem:[%s211 + $0x108] sm:$0xff]
        %s253 = scalar_lea.vmem %s1, 16
        %v254 = vld [vmem:[%s253] sm:$0xff]
        %v255 = vld [vmem:[%s253 + $0x8] sm:$0xf]
        %vm256 = vcmask 97280
        %v258 = vsel %vm256, %v219, 0
        %v261 = vsel %vm256, %v220, 0
        %v264 = vsel %vm256, %v221, 0
        %v267 = vsel %vm256, %v222, 0
        %v270 = vsel %vm256, %v223, 0
        %v273 = vsel %vm256, %v224, 0
        %v276 = vsel %vm256, %v225, 0
        %v279 = vsel %vm256, %v226, 0
        %v282 = vsel %vm256, %v227, 0
        %v285 = vsel %vm256, %v228, 0
        %v288 = vsel %vm256, %v229, 0
        %v291 = vsel %vm256, %v230, 0
        %v294 = vsel %vm256, %v231, 0
        %v297 = vsel %vm256, %v232, 0
        %v300 = vsel %vm256, %v233, 0
        %v303 = vsel %vm256, %v234, 0
        %v306 = vsel %vm256, %v235, 0
        %v309 = vsel %vm256, %v236, 0
        %v312 = vsel %vm256, %v237, 0
        %v315 = vsel %vm256, %v238, 0
        %v318 = vsel %vm256, %v239, 0
        %v321 = vsel %vm256, %v240, 0
        %v324 = vsel %vm256, %v241, 0
        %v327 = vsel %vm256, %v242, 0
        %v330 = vsel %vm256, %v243, 0
        %v333 = vsel %vm256, %v244, 0
        %v336 = vsel %vm256, %v245, 0
        %v339 = vsel %vm256, %v246, 0
        %v342 = vsel %vm256, %v247, 0
        %v345 = vsel %vm256, %v248, 0
        %v348 = vsel %vm256, %v251, 0
        %v351 = vsel %vm256, %v252, 0
        %vm353 = vcmask 1043456
        %v355 = vsel %vm353, %v255, 0
        %357 = vmatpush.msra.mxu0 0.0
        %358 = vmatpush.msra.mxu0 0.0
        %359 = vmatpush.msra.mxu0 0.0
        %360 = vmatpush.msra.mxu0 0.0
        %361 = vmatpush.msra.mxu0 0.0
        %362 = vmatpush.msra.mxu0 0.0
        %363 = vmatpush.msra.mxu0 0.0
        %364 = vmatpush.msra.mxu0 0.0
        %365 = vmatpush.msra.mxu0 0.0
        %366 = vmatpush.msra.mxu0 0.0
        %367 = vmatpush.msra.mxu0 0.0
        %368 = vmatpush.msra.mxu0 0.0
        %369 = vmatpush.msra.mxu0 0.0
        %370 = vmatpush.msra.mxu0 0.0
        %371 = vmatpush.msra.mxu0 %v355
        %372 = vmatpush.msra.mxu0 %v254
        %373 = vmatmul.f32.gmra.mxu0 %v258
        %v374 = vpop.f32.mrf.mxu0
        %v375 = vadd.f32 0.0, %v374
        %376 = vmatmul.f32.gmra.mxu0 %v261
        %v377 = vpop.f32.mrf.mxu0
        %v378 = vadd.f32 0.0, %v377
        %379 = vmatmul.f32.gmra.mxu0 %v264
        %v380 = vpop.f32.mrf.mxu0
        %v381 = vadd.f32 0.0, %v380
        %382 = vmatmul.f32.gmra.mxu0 %v267
        %v383 = vpop.f32.mrf.mxu0
        %v384 = vadd.f32 0.0, %v383
        %385 = vmatmul.f32.gmra.mxu0 %v270
        %v386 = vpop.f32.mrf.mxu0
        %v387 = vadd.f32 0.0, %v386
        %388 = vmatmul.f32.gmra.mxu0 %v273
        %v389 = vpop.f32.mrf.mxu0
        %v390 = vadd.f32 0.0, %v389
        %391 = vmatmul.f32.gmra.mxu0 %v276
        %v392 = vpop.f32.mrf.mxu0
        %v393 = vadd.f32 0.0, %v392
        %394 = vmatmul.f32.gmra.mxu0 %v279
        %v395 = vpop.f32.mrf.mxu0
        %v396 = vadd.f32 0.0, %v395
        %397 = vmatmul.f32.gmra.mxu0 %v282
        %v398 = vpop.f32.mrf.mxu0
        %v399 = vadd.f32 0.0, %v398
        %400 = vmatmul.f32.gmra.mxu0 %v285
        %v401 = vpop.f32.mrf.mxu0
        %v402 = vadd.f32 0.0, %v401
        %403 = vmatmul.f32.gmra.mxu0 %v288
        %v404 = vpop.f32.mrf.mxu0
        %v405 = vadd.f32 0.0, %v404
        %406 = vmatmul.f32.gmra.mxu0 %v291
        %v407 = vpop.f32.mrf.mxu0
        %v408 = vadd.f32 0.0, %v407
        %409 = vmatmul.f32.gmra.mxu0 %v294
        %v410 = vpop.f32.mrf.mxu0
        %v411 = vadd.f32 0.0, %v410
        %412 = vmatmul.f32.gmra.mxu0 %v297
        %v413 = vpop.f32.mrf.mxu0
        %v414 = vadd.f32 0.0, %v413
        %415 = vmatmul.f32.gmra.mxu0 %v300
        %v416 = vpop.f32.mrf.mxu0
        %v417 = vadd.f32 0.0, %v416
        %418 = vmatmul.f32.gmra.mxu0 %v303
        %v419 = vpop.f32.mrf.mxu0
        %v420 = vadd.f32 0.0, %v419
        %421 = vmatmul.f32.gmra.mxu0 %v306
        %v422 = vpop.f32.mrf.mxu0
        %v423 = vadd.f32 0.0, %v422
        %424 = vmatmul.f32.gmra.mxu0 %v309
        %v425 = vpop.f32.mrf.mxu0
        %v426 = vadd.f32 0.0, %v425
        %427 = vmatmul.f32.gmra.mxu0 %v312
        %v428 = vpop.f32.mrf.mxu0
        %v429 = vadd.f32 0.0, %v428
        %430 = vmatmul.f32.gmra.mxu0 %v315
        %v431 = vpop.f32.mrf.mxu0
        %v432 = vadd.f32 0.0, %v431
        %433 = vmatmul.f32.gmra.mxu0 %v318
        %v434 = vpop.f32.mrf.mxu0
        %v435 = vadd.f32 0.0, %v434
        %436 = vmatmul.f32.gmra.mxu0 %v321
        %v437 = vpop.f32.mrf.mxu0
        %v438 = vadd.f32 0.0, %v437
        %439 = vmatmul.f32.gmra.mxu0 %v324
        %v440 = vpop.f32.mrf.mxu0
        %v441 = vadd.f32 0.0, %v440
        %442 = vmatmul.f32.gmra.mxu0 %v327
        %v443 = vpop.f32.mrf.mxu0
        %v444 = vadd.f32 0.0, %v443
        %445 = vmatmul.f32.gmra.mxu0 %v330
        %v446 = vpop.f32.mrf.mxu0
        %v447 = vadd.f32 0.0, %v446
        %448 = vmatmul.f32.gmra.mxu0 %v333
        %v449 = vpop.f32.mrf.mxu0
        %v450 = vadd.f32 0.0, %v449
        %451 = vmatmul.f32.gmra.mxu0 %v336
        %v452 = vpop.f32.mrf.mxu0
        %v453 = vadd.f32 0.0, %v452
        %454 = vmatmul.f32.gmra.mxu0 %v339
        %v455 = vpop.f32.mrf.mxu0
        %v456 = vadd.f32 0.0, %v455
        %457 = vmatmul.f32.gmra.mxu0 %v342
        %v458 = vpop.f32.mrf.mxu0
        %v459 = vadd.f32 0.0, %v458
        %460 = vmatmul.f32.gmra.mxu0 %v345
        %v461 = vpop.f32.mrf.mxu0
        %v462 = vadd.f32 0.0, %v461
        %463 = vmatmul.f32.gmra.mxu0 %v348
        %v464 = vpop.f32.mrf.mxu0
        %v465 = vadd.f32 0.0, %v464
        %466 = vmatmul.f32.gmra.mxu0 %v351
        %v467 = vpop.f32.mrf.mxu0
        %v468 = vadd.f32 0.0, %v467
        %469 = vdwg.mxu0
        %v471 = vsel %vm256, %v217, 0
        %v474 = vsel %vm256, %v218, 0
        %v477 = vsel %vm353, %v250, 0
        %479 = vmatpush.msra.mxu0 0.0
        %480 = vmatpush.msra.mxu0 0.0
        %481 = vmatpush.msra.mxu0 0.0
        %482 = vmatpush.msra.mxu0 0.0
        %483 = vmatpush.msra.mxu0 0.0
        %484 = vmatpush.msra.mxu0 0.0
        %485 = vmatpush.msra.mxu0 0.0
        %486 = vmatpush.msra.mxu0 0.0
        %487 = vmatpush.msra.mxu0 0.0
        %488 = vmatpush.msra.mxu0 0.0
        %489 = vmatpush.msra.mxu0 0.0
        %490 = vmatpush.msra.mxu0 0.0
        %491 = vmatpush.msra.mxu0 0.0
        %492 = vmatpush.msra.mxu0 0.0
        %493 = vmatpush.msra.mxu0 %v477
        %494 = vmatpush.msra.mxu0 %v249
        %495 = vmatmul.f32.gmra.mxu0 %v471
        %v496 = vpop.f32.mrf.mxu0
        %v497 = vadd.f32 %v375, %v496
        %498 = vmatmul.f32.gmra.mxu0 %v474
        %v499 = vpop.f32.mrf.mxu0
        %v500 = vadd.f32 %v378, %v499
        %501 = vmatmul.f32.gmra.mxu0 %v258
        %v502 = vpop.f32.mrf.mxu0
        %v503 = vadd.f32 %v381, %v502
        %504 = vmatmul.f32.gmra.mxu0 %v261
        %v505 = vpop.f32.mrf.mxu0
        %v506 = vadd.f32 %v384, %v505
        %507 = vmatmul.f32.gmra.mxu0 %v264
        %v508 = vpop.f32.mrf.mxu0
        %v509 = vadd.f32 %v387, %v508
        %510 = vmatmul.f32.gmra.mxu0 %v267
        %v511 = vpop.f32.mrf.mxu0
        %v512 = vadd.f32 %v390, %v511
        %513 = vmatmul.f32.gmra.mxu0 %v270
        %v514 = vpop.f32.mrf.mxu0
        %v515 = vadd.f32 %v393, %v514
        %516 = vmatmul.f32.gmra.mxu0 %v273
        %v517 = vpop.f32.mrf.mxu0
        %v518 = vadd.f32 %v396, %v517
        %519 = vmatmul.f32.gmra.mxu0 %v276
        %v520 = vpop.f32.mrf.mxu0
        %v521 = vadd.f32 %v399, %v520
        %522 = vmatmul.f32.gmra.mxu0 %v279
        %v523 = vpop.f32.mrf.mxu0
        %v524 = vadd.f32 %v402, %v523
        %525 = vmatmul.f32.gmra.mxu0 %v282
        %v526 = vpop.f32.mrf.mxu0
        %v527 = vadd.f32 %v405, %v526
        %528 = vmatmul.f32.gmra.mxu0 %v285
        %v529 = vpop.f32.mrf.mxu0
        %v530 = vadd.f32 %v408, %v529
        %531 = vmatmul.f32.gmra.mxu0 %v288
        %v532 = vpop.f32.mrf.mxu0
        %v533 = vadd.f32 %v411, %v532
        %534 = vmatmul.f32.gmra.mxu0 %v291
        %v535 = vpop.f32.mrf.mxu0
        %v536 = vadd.f32 %v414, %v535
        %537 = vmatmul.f32.gmra.mxu0 %v294
        %v538 = vpop.f32.mrf.mxu0
        %v539 = vadd.f32 %v417, %v538
        %540 = vmatmul.f32.gmra.mxu0 %v297
        %v541 = vpop.f32.mrf.mxu0
        %v542 = vadd.f32 %v420, %v541
        %543 = vmatmul.f32.gmra.mxu0 %v300
        %v544 = vpop.f32.mrf.mxu0
        %v545 = vadd.f32 %v423, %v544
        %546 = vmatmul.f32.gmra.mxu0 %v303
        %v547 = vpop.f32.mrf.mxu0
        %v548 = vadd.f32 %v426, %v547
        %549 = vmatmul.f32.gmra.mxu0 %v306
        %v550 = vpop.f32.mrf.mxu0
        %v551 = vadd.f32 %v429, %v550
        %552 = vmatmul.f32.gmra.mxu0 %v309
        %v553 = vpop.f32.mrf.mxu0
        %v554 = vadd.f32 %v432, %v553
        %555 = vmatmul.f32.gmra.mxu0 %v312
        %v556 = vpop.f32.mrf.mxu0
        %v557 = vadd.f32 %v435, %v556
        %558 = vmatmul.f32.gmra.mxu0 %v315
        %v559 = vpop.f32.mrf.mxu0
        %v560 = vadd.f32 %v438, %v559
        %561 = vmatmul.f32.gmra.mxu0 %v318
        %v562 = vpop.f32.mrf.mxu0
        %v563 = vadd.f32 %v441, %v562
        %564 = vmatmul.f32.gmra.mxu0 %v321
        %v565 = vpop.f32.mrf.mxu0
        %v566 = vadd.f32 %v444, %v565
        %567 = vmatmul.f32.gmra.mxu0 %v324
        %v568 = vpop.f32.mrf.mxu0
        %v569 = vadd.f32 %v447, %v568
        %570 = vmatmul.f32.gmra.mxu0 %v327
        %v571 = vpop.f32.mrf.mxu0
        %v572 = vadd.f32 %v450, %v571
        %573 = vmatmul.f32.gmra.mxu0 %v330
        %v574 = vpop.f32.mrf.mxu0
        %v575 = vadd.f32 %v453, %v574
        %576 = vmatmul.f32.gmra.mxu0 %v333
        %v577 = vpop.f32.mrf.mxu0
        %v578 = vadd.f32 %v456, %v577
        %579 = vmatmul.f32.gmra.mxu0 %v336
        %v580 = vpop.f32.mrf.mxu0
        %v581 = vadd.f32 %v459, %v580
        %582 = vmatmul.f32.gmra.mxu0 %v339
        %v583 = vpop.f32.mrf.mxu0
        %v584 = vadd.f32 %v462, %v583
        %585 = vmatmul.f32.gmra.mxu0 %v342
        %v586 = vpop.f32.mrf.mxu0
        %v587 = vadd.f32 %v465, %v586
        %588 = vmatmul.f32.gmra.mxu0 %v345
        %v589 = vpop.f32.mrf.mxu0
        %v590 = vadd.f32 %v468, %v589
        %591 = vdwg.mxu0
        %v592 = vld [vmem:[%s211 + $0x20] sm:$0xff]
        %v593 = vld [vmem:[%s211 + $0x28] sm:$0xff]
        %v594 = vld [vmem:[%s211 + $0x30] sm:$0xff]
        %v595 = vld [vmem:[%s211 + $0x38] sm:$0xff]
        %v596 = vld [vmem:[%s211 + $0x40] sm:$0xff]
        %v597 = vld [vmem:[%s211 + $0x48] sm:$0xff]
        %v598 = vld [vmem:[%s211 + $0x50] sm:$0xff]
        %v599 = vld [vmem:[%s211 + $0x58] sm:$0xff]
        %v600 = vld [vmem:[%s211 + $0x60] sm:$0xff]
        %v601 = vld [vmem:[%s211 + $0x68] sm:$0xff]
        %v602 = vld [vmem:[%s211 + $0x70] sm:$0xff]
        %v603 = vld [vmem:[%s211 + $0x78] sm:$0xff]
        %v604 = vld [vmem:[%s211 + $0x80] sm:$0xff]
        %v605 = vld [vmem:[%s211 + $0x88] sm:$0xff]
        %v606 = vld [vmem:[%s211 + $0x90] sm:$0xff]
        %v607 = vld [vmem:[%s211 + $0x98] sm:$0xff]
        %v608 = vld [vmem:[%s211 + $0xa0] sm:$0xff]
        %v609 = vld [vmem:[%s211 + $0xa8] sm:$0xff]
        %v610 = vld [vmem:[%s211 + $0xb0] sm:$0xff]
        %v611 = vld [vmem:[%s211 + $0xb8] sm:$0xff]
        %v612 = vld [vmem:[%s211 + $0xc0] sm:$0xff]
        %v613 = vld [vmem:[%s211 + $0xc8] sm:$0xff]
        %v614 = vld [vmem:[%s211 + $0xd0] sm:$0xff]
        %v615 = vld [vmem:[%s211 + $0xd8] sm:$0xff]
        %v616 = vld [vmem:[%s211 + $0xe0] sm:$0xff]
        %v617 = vld [vmem:[%s211 + $0xe8] sm:$0xff]
        %v618 = vld [vmem:[%s211 + $0xf0] sm:$0xff]
        %v619 = vld [vmem:[%s211 + $0xf8] sm:$0xff]
        %v620 = vld [vmem:[%s211 + $0x100] sm:$0xff]
        %v621 = vld [vmem:[%s211 + $0x108] sm:$0xff]
        %v622 = vld [vmem:[%s211 + $0x110] sm:$0xff]
        %v623 = vld [vmem:[%s211 + $0x118] sm:$0xff]
        %s624 = scalar_lea.vmem %s1, 32
        %v625 = vld [vmem:[%s624] sm:$0xff]
        %v626 = vld [vmem:[%s624 + $0x8] sm:$0xf]
        %v628 = vsel %vm256, %v592, 0
        %v631 = vsel %vm256, %v593, 0
        %v634 = vsel %vm256, %v594, 0
        %v637 = vsel %vm256, %v595, 0
        %v640 = vsel %vm256, %v596, 0
        %v643 = vsel %vm256, %v597, 0
        %v646 = vsel %vm256, %v598, 0
        %v649 = vsel %vm256, %v599, 0
        %v652 = vsel %vm256, %v600, 0
        %v655 = vsel %vm256, %v601, 0
        %v658 = vsel %vm256, %v602, 0
        %v661 = vsel %vm256, %v603, 0
        %v664 = vsel %vm256, %v604, 0
        %v667 = vsel %vm256, %v605, 0
        %v670 = vsel %vm256, %v606, 0
        %v673 = vsel %vm256, %v607, 0
        %v676 = vsel %vm256, %v608, 0
        %v679 = vsel %vm256, %v609, 0
        %v682 = vsel %vm256, %v610, 0
        %v685 = vsel %vm256, %v611, 0
        %v688 = vsel %vm256, %v612, 0
        %v691 = vsel %vm256, %v613, 0
        %v694 = vsel %vm256, %v614, 0
        %v697 = vsel %vm256, %v615, 0
        %v700 = vsel %vm256, %v616, 0
        %v703 = vsel %vm256, %v617, 0
        %v706 = vsel %vm256, %v618, 0
        %v709 = vsel %vm256, %v619, 0
        %v712 = vsel %vm256, %v620, 0
        %v715 = vsel %vm256, %v621, 0
        %v718 = vsel %vm256, %v622, 0
        %v721 = vsel %vm256, %v623, 0
        %v724 = vsel %vm353, %v626, 0
        %726 = vmatpush.msra.mxu0 0.0
        %727 = vmatpush.msra.mxu0 0.0
        %728 = vmatpush.msra.mxu0 0.0
        %729 = vmatpush.msra.mxu0 0.0
        %730 = vmatpush.msra.mxu0 0.0
        %731 = vmatpush.msra.mxu0 0.0
        %732 = vmatpush.msra.mxu0 0.0
        %733 = vmatpush.msra.mxu0 0.0
        %734 = vmatpush.msra.mxu0 0.0
        %735 = vmatpush.msra.mxu0 0.0
        %736 = vmatpush.msra.mxu0 0.0
        %737 = vmatpush.msra.mxu0 0.0
        %738 = vmatpush.msra.mxu0 0.0
        %739 = vmatpush.msra.mxu0 0.0
        %740 = vmatpush.msra.mxu0 %v724
        %741 = vmatpush.msra.mxu0 %v625
        %742 = vmatmul.f32.gmra.mxu0 %v628
        %v743 = vpop.f32.mrf.mxu0
        %v744 = vadd.f32 0.0, %v743
        %745 = vmatmul.f32.gmra.mxu0 %v631
        %v746 = vpop.f32.mrf.mxu0
        %v747 = vadd.f32 0.0, %v746
        %748 = vmatmul.f32.gmra.mxu0 %v634
        %v749 = vpop.f32.mrf.mxu0
        %v750 = vadd.f32 0.0, %v749
        %751 = vmatmul.f32.gmra.mxu0 %v637
        %v752 = vpop.f32.mrf.mxu0
        %v753 = vadd.f32 0.0, %v752
        %754 = vmatmul.f32.gmra.mxu0 %v640
        %v755 = vpop.f32.mrf.mxu0
        %v756 = vadd.f32 0.0, %v755
        %757 = vmatmul.f32.gmra.mxu0 %v643
        %v758 = vpop.f32.mrf.mxu0
        %v759 = vadd.f32 0.0, %v758
        %760 = vmatmul.f32.gmra.mxu0 %v646
        %v761 = vpop.f32.mrf.mxu0
        %v762 = vadd.f32 0.0, %v761
        %763 = vmatmul.f32.gmra.mxu0 %v649
        %v764 = vpop.f32.mrf.mxu0
        %v765 = vadd.f32 0.0, %v764
        %766 = vmatmul.f32.gmra.mxu0 %v652
        %v767 = vpop.f32.mrf.mxu0
        %v768 = vadd.f32 0.0, %v767
        %769 = vmatmul.f32.gmra.mxu0 %v655
        %v770 = vpop.f32.mrf.mxu0
        %v771 = vadd.f32 0.0, %v770
        %772 = vmatmul.f32.gmra.mxu0 %v658
        %v773 = vpop.f32.mrf.mxu0
        %v774 = vadd.f32 0.0, %v773
        %775 = vmatmul.f32.gmra.mxu0 %v661
        %v776 = vpop.f32.mrf.mxu0
        %v777 = vadd.f32 0.0, %v776
        %778 = vmatmul.f32.gmra.mxu0 %v664
        %v779 = vpop.f32.mrf.mxu0
        %v780 = vadd.f32 0.0, %v779
        %781 = vmatmul.f32.gmra.mxu0 %v667
        %v782 = vpop.f32.mrf.mxu0
        %v783 = vadd.f32 0.0, %v782
        %784 = vmatmul.f32.gmra.mxu0 %v670
        %v785 = vpop.f32.mrf.mxu0
        %v786 = vadd.f32 0.0, %v785
        %787 = vmatmul.f32.gmra.mxu0 %v673
        %v788 = vpop.f32.mrf.mxu0
        %v789 = vadd.f32 0.0, %v788
        %790 = vmatmul.f32.gmra.mxu0 %v676
        %v791 = vpop.f32.mrf.mxu0
        %v792 = vadd.f32 0.0, %v791
        %793 = vmatmul.f32.gmra.mxu0 %v679
        %v794 = vpop.f32.mrf.mxu0
        %v795 = vadd.f32 0.0, %v794
        %796 = vmatmul.f32.gmra.mxu0 %v682
        %v797 = vpop.f32.mrf.mxu0
        %v798 = vadd.f32 0.0, %v797
        %799 = vmatmul.f32.gmra.mxu0 %v685
        %v800 = vpop.f32.mrf.mxu0
        %v801 = vadd.f32 0.0, %v800
        %802 = vmatmul.f32.gmra.mxu0 %v688
        %v803 = vpop.f32.mrf.mxu0
        %v804 = vadd.f32 0.0, %v803
        %805 = vmatmul.f32.gmra.mxu0 %v691
        %v806 = vpop.f32.mrf.mxu0
        %v807 = vadd.f32 0.0, %v806
        %808 = vmatmul.f32.gmra.mxu0 %v694
        %v809 = vpop.f32.mrf.mxu0
        %v810 = vadd.f32 0.0, %v809
        %811 = vmatmul.f32.gmra.mxu0 %v697
        %v812 = vpop.f32.mrf.mxu0
        %v813 = vadd.f32 0.0, %v812
        %814 = vmatmul.f32.gmra.mxu0 %v700
        %v815 = vpop.f32.mrf.mxu0
        %v816 = vadd.f32 0.0, %v815
        %817 = vmatmul.f32.gmra.mxu0 %v703
        %v818 = vpop.f32.mrf.mxu0
        %v819 = vadd.f32 0.0, %v818
        %820 = vmatmul.f32.gmra.mxu0 %v706
        %v821 = vpop.f32.mrf.mxu0
        %v822 = vadd.f32 0.0, %v821
        %823 = vmatmul.f32.gmra.mxu0 %v709
        %v824 = vpop.f32.mrf.mxu0
        %v825 = vadd.f32 0.0, %v824
        %826 = vmatmul.f32.gmra.mxu0 %v712
        %v827 = vpop.f32.mrf.mxu0
        %v828 = vadd.f32 0.0, %v827
        %829 = vmatmul.f32.gmra.mxu0 %v715
        %v830 = vpop.f32.mrf.mxu0
        %v831 = vadd.f32 0.0, %v830
        %832 = vmatmul.f32.gmra.mxu0 %v718
        %v833 = vpop.f32.mrf.mxu0
        %v834 = vadd.f32 0.0, %v833
        %835 = vmatmul.f32.gmra.mxu0 %v721
        %v836 = vpop.f32.mrf.mxu0
        %v837 = vadd.f32 0.0, %v836
        %838 = vdwg.mxu0
        %v839 = vadd.f32 %v497, %v744
        %v840 = vadd.f32 %v500, %v747
        %v841 = vadd.f32 %v503, %v750
        %v842 = vadd.f32 %v506, %v753
        %v843 = vadd.f32 %v509, %v756
        %v844 = vadd.f32 %v512, %v759
        %v845 = vadd.f32 %v515, %v762
        %v846 = vadd.f32 %v518, %v765
        %v847 = vadd.f32 %v521, %v768
        %v848 = vadd.f32 %v524, %v771
        %v849 = vadd.f32 %v527, %v774
        %v850 = vadd.f32 %v530, %v777
        %v851 = vadd.f32 %v533, %v780
        %v852 = vadd.f32 %v536, %v783
        %v853 = vadd.f32 %v539, %v786
        %v854 = vadd.f32 %v542, %v789
        %v855 = vadd.f32 %v545, %v792
        %v856 = vadd.f32 %v548, %v795
        %v857 = vadd.f32 %v551, %v798
        %v858 = vadd.f32 %v554, %v801
        %v859 = vadd.f32 %v557, %v804
        %v860 = vadd.f32 %v560, %v807
        %v861 = vadd.f32 %v563, %v810
        %v862 = vadd.f32 %v566, %v813
        %v863 = vadd.f32 %v569, %v816
        %v864 = vadd.f32 %v572, %v819
        %v865 = vadd.f32 %v575, %v822
        %v866 = vadd.f32 %v578, %v825
        %v867 = vadd.f32 %v581, %v828
        %v868 = vadd.f32 %v584, %v831
        %v869 = vadd.f32 %v587, %v834
        %v870 = vadd.f32 %v590, %v837
        %vm871 = vcmask 64512
        %872 = vst.msk [vmem:[%s216] sm:$0xff] %vm871, %v839
        %873 = vst.msk [vmem:[%s216 + $0x8] sm:$0xff] %vm871, %v840
        %874 = vst.msk [vmem:[%s216 + $0x10] sm:$0xff] %vm871, %v841
        %875 = vst.msk [vmem:[%s216 + $0x18] sm:$0xff] %vm871, %v842
        %876 = vst.msk [vmem:[%s216 + $0x20] sm:$0xff] %vm871, %v843
        %877 = vst.msk [vmem:[%s216 + $0x28] sm:$0xff] %vm871, %v844
        %878 = vst.msk [vmem:[%s216 + $0x30] sm:$0xff] %vm871, %v845
        %879 = vst.msk [vmem:[%s216 + $0x38] sm:$0xff] %vm871, %v846
        %880 = vst.msk [vmem:[%s216 + $0x40] sm:$0xff] %vm871, %v847
        %881 = vst.msk [vmem:[%s216 + $0x48] sm:$0xff] %vm871, %v848
        %882 = vst.msk [vmem:[%s216 + $0x50] sm:$0xff] %vm871, %v849
        %883 = vst.msk [vmem:[%s216 + $0x58] sm:$0xff] %vm871, %v850
        %884 = vst.msk [vmem:[%s216 + $0x60] sm:$0xff] %vm871, %v851
        %885 = vst.msk [vmem:[%s216 + $0x68] sm:$0xff] %vm871, %v852
        %886 = vst.msk [vmem:[%s216 + $0x70] sm:$0xff] %vm871, %v853
        %887 = vst.msk [vmem:[%s216 + $0x78] sm:$0xff] %vm871, %v854
        %888 = vst.msk [vmem:[%s216 + $0x80] sm:$0xff] %vm871, %v855
        %889 = vst.msk [vmem:[%s216 + $0x88] sm:$0xff] %vm871, %v856
        %890 = vst.msk [vmem:[%s216 + $0x90] sm:$0xff] %vm871, %v857
        %891 = vst.msk [vmem:[%s216 + $0x98] sm:$0xff] %vm871, %v858
        %892 = vst.msk [vmem:[%s216 + $0xa0] sm:$0xff] %vm871, %v859
        %893 = vst.msk [vmem:[%s216 + $0xa8] sm:$0xff] %vm871, %v860
        %894 = vst.msk [vmem:[%s216 + $0xb0] sm:$0xff] %vm871, %v861
        %895 = vst.msk [vmem:[%s216 + $0xb8] sm:$0xff] %vm871, %v862
        %896 = vst.msk [vmem:[%s216 + $0xc0] sm:$0xff] %vm871, %v863
        %897 = vst.msk [vmem:[%s216 + $0xc8] sm:$0xff] %vm871, %v864
        %898 = vst.msk [vmem:[%s216 + $0xd0] sm:$0xff] %vm871, %v865
        %899 = vst.msk [vmem:[%s216 + $0xd8] sm:$0xff] %vm871, %v866
        %900 = vst.msk [vmem:[%s216 + $0xe0] sm:$0xff] %vm871, %v867
        %901 = vst.msk [vmem:[%s216 + $0xe8] sm:$0xff] %vm871, %v868
        %902 = vst.msk [vmem:[%s216 + $0xf0] sm:$0xff] %vm871, %v869
        %903 = vst.msk [vmem:[%s216 + $0xf8] sm:$0xff] %vm871, %v870
        %v904 = vsel %vm871, %v839, 0.0
        %v905 = vsel %vm871, %v840, 0.0
        %v906 = vadd.f32 %v904, %v905
        %v907 = vsel %vm871, %v841, 0.0
        %v908 = vadd.f32 %v906, %v907
        %v909 = vsel %vm871, %v842, 0.0
        %v910 = vadd.f32 %v908, %v909
        %v911 = vsel %vm871, %v843, 0.0
        %v912 = vadd.f32 %v910, %v911
        %v913 = vsel %vm871, %v844, 0.0
        %v914 = vadd.f32 %v912, %v913
        %v915 = vsel %vm871, %v845, 0.0
        %v916 = vadd.f32 %v914, %v915
        %v917 = vsel %vm871, %v846, 0.0
        %v918 = vadd.f32 %v916, %v917
        %v919 = vsel %vm871, %v847, 0.0
        %v920 = vadd.f32 %v918, %v919
        %v921 = vsel %vm871, %v848, 0.0
        %v922 = vadd.f32 %v920, %v921
        %v923 = vsel %vm871, %v849, 0.0
        %v924 = vadd.f32 %v922, %v923
        %v925 = vsel %vm871, %v850, 0.0
        %v926 = vadd.f32 %v924, %v925
        %v927 = vsel %vm871, %v851, 0.0
        %v928 = vadd.f32 %v926, %v927
        %v929 = vsel %vm871, %v852, 0.0
        %v930 = vadd.f32 %v928, %v929
        %v931 = vsel %vm871, %v853, 0.0
        %v932 = vadd.f32 %v930, %v931
        %v933 = vsel %vm871, %v854, 0.0
        %v934 = vadd.f32 %v932, %v933
        %v935 = vsel %vm871, %v855, 0.0
        %v936 = vadd.f32 %v934, %v935
        %v937 = vsel %vm871, %v856, 0.0
        %v938 = vadd.f32 %v936, %v937
        %v939 = vsel %vm871, %v857, 0.0
        %v940 = vadd.f32 %v938, %v939
        %v941 = vsel %vm871, %v858, 0.0
        %v942 = vadd.f32 %v940, %v941
        %v943 = vsel %vm871, %v859, 0.0
        %v944 = vadd.f32 %v942, %v943
        %v945 = vsel %vm871, %v860, 0.0
        %v946 = vadd.f32 %v944, %v945
        %v947 = vsel %vm871, %v861, 0.0
        %v948 = vadd.f32 %v946, %v947
        %v949 = vsel %vm871, %v862, 0.0
        %v950 = vadd.f32 %v948, %v949
        %v951 = vsel %vm871, %v863, 0.0
        %v952 = vadd.f32 %v950, %v951
        %v953 = vsel %vm871, %v864, 0.0
        %v954 = vadd.f32 %v952, %v953
        %v955 = vsel %vm871, %v865, 0.0
        %v956 = vadd.f32 %v954, %v955
        %v957 = vsel %vm871, %v866, 0.0
        %v958 = vadd.f32 %v956, %v957
        %v959 = vsel %vm871, %v867, 0.0
        %v960 = vadd.f32 %v958, %v959
        %v961 = vsel %vm871, %v868, 0.0
        %v962 = vadd.f32 %v960, %v961
        %v963 = vsel %vm871, %v869, 0.0
        %v964 = vadd.f32 %v962, %v963
        %v965 = vsel %vm871, %v870, 0.0
        %v966 = vadd.f32 %v964, %v965
        %v967 = vrot.slane %v966, 4
        %v968 = vadd.f32 %v966, %v967
        %v969 = vrot.slane %v968, 2
        %v970 = vadd.f32 %v968, %v969
        %v971 = vrot.slane %v970, 1
        %v972 = vadd.f32 %v970, %v971
        %v973 = vadd.f32 %v972, 0.0
        %v974 = vmul.f32 %v839, %v839
        %v975 = vmul.f32 %v840, %v840
        %v976 = vmul.f32 %v841, %v841
        %v977 = vmul.f32 %v842, %v842
        %v978 = vmul.f32 %v843, %v843
        %v979 = vmul.f32 %v844, %v844
        %v980 = vmul.f32 %v845, %v845
        %v981 = vmul.f32 %v846, %v846
        %v982 = vmul.f32 %v847, %v847
        %v983 = vmul.f32 %v848, %v848
        %v984 = vmul.f32 %v849, %v849
        %v985 = vmul.f32 %v850, %v850
        %v986 = vmul.f32 %v851, %v851
        %v987 = vmul.f32 %v852, %v852
        %v988 = vmul.f32 %v853, %v853
        %v989 = vmul.f32 %v854, %v854
        %v990 = vmul.f32 %v855, %v855
        %v991 = vmul.f32 %v856, %v856
        %v992 = vmul.f32 %v857, %v857
        %v993 = vmul.f32 %v858, %v858
        %v994 = vmul.f32 %v859, %v859
        %v995 = vmul.f32 %v860, %v860
        %v996 = vmul.f32 %v861, %v861
        %v997 = vmul.f32 %v862, %v862
        %v998 = vmul.f32 %v863, %v863
        %v999 = vmul.f32 %v864, %v864
        %v1000 = vmul.f32 %v865, %v865
        %v1001 = vmul.f32 %v866, %v866
        %v1002 = vmul.f32 %v867, %v867
        %v1003 = vmul.f32 %v868, %v868
        %v1004 = vmul.f32 %v869, %v869
        %v1005 = vmul.f32 %v870, %v870
        %v1006 = vsel %vm871, %v974, 0.0
        %v1007 = vsel %vm871, %v975, 0.0
        %v1008 = vadd.f32 %v1006, %v1007
        %v1009 = vsel %vm871, %v976, 0.0
        %v1010 = vadd.f32 %v1008, %v1009
        %v1011 = vsel %vm871, %v977, 0.0
        %v1012 = vadd.f32 %v1010, %v1011
        %v1013 = vsel %vm871, %v978, 0.0
        %v1014 = vadd.f32 %v1012, %v1013
        %v1015 = vsel %vm871, %v979, 0.0
        %v1016 = vadd.f32 %v1014, %v1015
        %v1017 = vsel %vm871, %v980, 0.0
        %v1018 = vadd.f32 %v1016, %v1017
        %v1019 = vsel %vm871, %v981, 0.0
        %v1020 = vadd.f32 %v1018, %v1019
        %v1021 = vsel %vm871, %v982, 0.0
        %v1022 = vadd.f32 %v1020, %v1021
        %v1023 = vsel %vm871, %v983, 0.0
        %v1024 = vadd.f32 %v1022, %v1023
        %v1025 = vsel %vm871, %v984, 0.0
        %v1026 = vadd.f32 %v1024, %v1025
        %v1027 = vsel %vm871, %v985, 0.0
        %v1028 = vadd.f32 %v1026, %v1027
        %v1029 = vsel %vm871, %v986, 0.0
        %v1030 = vadd.f32 %v1028, %v1029
        %v1031 = vsel %vm871, %v987, 0.0
        %v1032 = vadd.f32 %v1030, %v1031
        %v1033 = vsel %vm871, %v988, 0.0
        %v1034 = vadd.f32 %v1032, %v1033
        %v1035 = vsel %vm871, %v989, 0.0
        %v1036 = vadd.f32 %v1034, %v1035
        %v1037 = vsel %vm871, %v990, 0.0
        %v1038 = vadd.f32 %v1036, %v1037
        %v1039 = vsel %vm871, %v991, 0.0
        %v1040 = vadd.f32 %v1038, %v1039
        %v1041 = vsel %vm871, %v992, 0.0
        %v1042 = vadd.f32 %v1040, %v1041
        %v1043 = vsel %vm871, %v993, 0.0
        %v1044 = vadd.f32 %v1042, %v1043
        %v1045 = vsel %vm871, %v994, 0.0
        %v1046 = vadd.f32 %v1044, %v1045
        %v1047 = vsel %vm871, %v995, 0.0
        %v1048 = vadd.f32 %v1046, %v1047
        %v1049 = vsel %vm871, %v996, 0.0
        %v1050 = vadd.f32 %v1048, %v1049
        %v1051 = vsel %vm871, %v997, 0.0
        %v1052 = vadd.f32 %v1050, %v1051
        %v1053 = vsel %vm871, %v998, 0.0
        %v1054 = vadd.f32 %v1052, %v1053
        %v1055 = vsel %vm871, %v999, 0.0
        %v1056 = vadd.f32 %v1054, %v1055
        %v1057 = vsel %vm871, %v1000, 0.0
        %v1058 = vadd.f32 %v1056, %v1057
        %v1059 = vsel %vm871, %v1001, 0.0
        %v1060 = vadd.f32 %v1058, %v1059
        %v1061 = vsel %vm871, %v1002, 0.0
        %v1062 = vadd.f32 %v1060, %v1061
        %v1063 = vsel %vm871, %v1003, 0.0
        %v1064 = vadd.f32 %v1062, %v1063
        %v1065 = vsel %vm871, %v1004, 0.0
        %v1066 = vadd.f32 %v1064, %v1065
        %v1067 = vsel %vm871, %v1005, 0.0
        %v1068 = vadd.f32 %v1066, %v1067
        %v1069 = vrot.slane %v1068, 4
        %v1070 = vadd.f32 %v1068, %v1069
        %v1071 = vrot.slane %v1070, 2
        %v1072 = vadd.f32 %v1070, %v1071
        %v1073 = vrot.slane %v1072, 1
        %v1074 = vadd.f32 %v1072, %v1073
        %v1075 = vadd.f32 %v1074, 0.0
        %vm1076 = vcmask 57344
        %1077 = vst.msk [vmem:[%s200] sm:$0x1] %vm1076, %v973
        %1078 = vst.msk [vmem:[%s206] sm:$0x1] %vm1076, %v1075
        %p1079 = scmp.lt.s32.totalorder %s22, 1
        %s1080 = scalar_select %p1079, %s22, 1
        %s1081 = smul.addr %s1080, 32
        %s1082 = smul.addr %s1081, 8
        %s1083 = scalar_lea.vmem %s2, %s1082
        %s1084 = sand.u32 %s103, 1
        %s1085 = scalar_lea.sflag [#allocation3], %s1084
        %s1086 = sand.u32 %s103, 1
        %s1087 = scalar_lea.vmem [#allocation2], %s1086
        %s1088 = sand.u32 %s129, 1
        %s1089 = scalar_lea.sflag [#allocation5], %s1088
        %s1090 = sand.u32 %s129, 1
        %s1091 = scalar_lea.vmem [#allocation4], %s1090
        // Predicated region
        $region29: #{tpu_custom_call.1} parent=27 // pred_check
          %p1092 = pneg %p87
        $region30: #{tpu_custom_call.1} parent=27 // pred_check_branch
          %1094 = sbr.rel (%p1092) target = $region32
        $region31: #{tpu_custom_call.1} parent=27 // pred_region
          _
        $region32: #{tpu_custom_call.1} parent=27 // pred_fallthru
          _
        // Predicated region
        $region33: #{tpu_custom_call.1} parent=27 // pred_check
          %p1095 = pneg %p113
        $region34: #{tpu_custom_call.1} parent=27 // pred_check_branch
          %1097 = sbr.rel (%p1095) target = $region36
        $region35: #{tpu_custom_call.1} parent=27 // pred_region
          %1099 = vsyncadd %s1085, 0
          %s1100 = scalar_lea.hbm %s3, %s22
          %s1102 = sshll.u32 %s1087, 4
          %s1103 = int_to_ptr.vmem [resolvable:$true] %s1102
          %s1104 = sshll.u32 %s1100, 4
          %s1105 = int_to_ptr.hbm [resolvable:$true] %s1104
          %1107 = dma.vmem_to_hbm [thread:$0]  %s1103, 16, %s1105, %s1085
        $region36: #{tpu_custom_call.1} parent=27 // pred_fallthru
          _
        // Predicated region
        $region37: #{tpu_custom_call.1} parent=27 // pred_check
          %p1108 = pneg %p139
        $region38: #{tpu_custom_call.1} parent=27 // pred_check_branch
          %1110 = sbr.rel (%p1108) target = $region40
        $region39: #{tpu_custom_call.1} parent=27 // pred_region
          %1112 = vsyncadd %s1089, 0
          %s1113 = scalar_lea.hbm %s4, %s22
          %s1115 = sshll.u32 %s1091, 4
          %s1116 = int_to_ptr.vmem [resolvable:$true] %s1115
          %s1117 = sshll.u32 %s1113, 4
          %s1118 = int_to_ptr.hbm [resolvable:$true] %s1117
          %1120 = dma.vmem_to_hbm [thread:$0]  %s1116, 16, %s1118, %s1089
        $region40: #{tpu_custom_call.1} parent=27 // pred_fallthru
          _
      $region28: #{tpu_custom_call.1} parent=5 // pred_fallthru
        _
      %p1121 = scmp.le.s32.totalorder 2, %s17
      // Predicated region
      $region41: #{tpu_custom_call.1} parent=5 // pred_check
        %p1122 = pneg %p1121
      $region42: #{tpu_custom_call.1} parent=5 // pred_check_branch
        %1124 = sbr.rel (%p1122) target = $region44
      $region43: #{tpu_custom_call.1} parent=5 // pred_region
        %s1125 = ssub.s32 %s17, 2
        // Predicated region
        $region45: #{tpu_custom_call.1} parent=43 // pred_check
          %p1126 = pneg %p93
        $region46: #{tpu_custom_call.1} parent=43 // pred_check_branch
          %1128 = sbr.rel (%p1126) target = $region48
        $region47: #{tpu_custom_call.1} parent=43 // pred_region
          %p1129 = scmp.lt.s32.totalorder %s23, 1
          %s1130 = scalar_select %p1129, %s23, 1
          %s1131 = smul.addr %s1130, 32
          %s1132 = smul.addr %s1131, 8
          %s1133 = scalar_lea.vmem %s2, %s1132
        $region48: #{tpu_custom_call.1} parent=43 // pred_fallthru
          _
        // Predicated region
        $region49: #{tpu_custom_call.1} parent=43 // pred_check
          %p1134 = pneg %p119
        $region50: #{tpu_custom_call.1} parent=43 // pred_check_branch
          %1136 = sbr.rel (%p1134) target = $region52
        $region51: #{tpu_custom_call.1} parent=43 // pred_region
          %s1137 = sand.u32 %s104, 1
          %s1138 = scalar_lea.sflag [#allocation3], %s1137
          %s1139 = sand.u32 %s104, 1
          %s1140 = scalar_lea.vmem [#allocation2], %s1139
          %1142 = dma.done %s1138, 16
        $region52: #{tpu_custom_call.1} parent=43 // pred_fallthru
          _
        // Predicated region
        $region53: #{tpu_custom_call.1} parent=43 // pred_check
          %p1143 = pneg %p145
        $region54: #{tpu_custom_call.1} parent=43 // pred_check_branch
          %1145 = sbr.rel (%p1143) target = $region56
        $region55: #{tpu_custom_call.1} parent=43 // pred_region
          %s1146 = sand.u32 %s130, 1
          %s1147 = scalar_lea.sflag [#allocation5], %s1146
          %s1148 = sand.u32 %s130, 1
          %s1149 = scalar_lea.vmem [#allocation4], %s1148
          %1151 = dma.done %s1147, 16
        $region56: #{tpu_custom_call.1} parent=43 // pred_fallthru
          _
      $region44: #{tpu_custom_call.1} parent=5 // pred_fallthru
        _
    $region6: #{tpu_custom_call.1} parent=1 // loop_footer
      %s21 = sadd.s32 1, %s17
    $region7: #{tpu_custom_call.1} parent=1 // loop_footer_branch
      %16 = sbr.rel target = $region3
    $region8: #{tpu_custom_call.1} parent=1 // loop_exit
      _
    %1152 = vsyncpa [#allocation3], 1
    %s1153 = scalar_lea.sflag [#allocation3], 1
    %1154 = vsyncpa %s1153, 1
    %1155 = vsyncpa [#allocation5], 1
    %s1156 = scalar_lea.sflag [#allocation5], 1
    %1157 = vsyncpa %s1156, 1

</llo_original>
